<compile_context>
chip_gen: v7x
topology: tpu7x:2x2x1
jax: 0.10.0
libtpu: 0.0.40
codegen_flags: <defaults>
</compile_context>

<pallas_src>
import jax
import jax.numpy as jnp
from jax.experimental import pallas as pl
from jax.experimental.pallas import tpu as pltpu

LANES = 128            # f32 vreg lane width
MAX_BLOCK_ROWS = 8192  # (8192, 128) f32 block = 4 MiB per buffer


def _affine_kernel(wb_ref, x_ref, o_ref):
    # wb_ref: (2,) f32 in SMEM (scalar prefetch) -> [w, b]
    # x_ref / o_ref: (block_rows, 128) f32 in VMEM
    w = wb_ref[0]
    b = wb_ref[1]
    o_ref[...] = x_ref[...] * w + b


def linear_forward(x, weight, bias):
    """y = x @ weight.T + bias for in_features = out_features = 1.

    x: [N, 1] float32, weight: [1, 1] float32, bias: [1] float32 -> [N, 1].
    """
    n = x.shape[0]
    xf = x.reshape(-1)
    if xf.dtype != jnp.float32:
        xf = xf.astype(jnp.float32)

    # Lane-dense slab [rows, 128]; pad only the ragged < 128-element tail.
    rows = (n + LANES - 1) // LANES
    padded = rows * LANES
    pad_amount = padded - n
    if pad_amount:
        xf = jnp.pad(xf, (0, pad_amount))
    x2d = xf.reshape(rows, LANES)

    # Block: full slab if it fits, else fixed 8192-row tiles with a partial
    # last block handled by Pallas (block_shape stays (8,128)-divisible).
    block_rows = min(rows, MAX_BLOCK_ROWS)
    grid = (pl.cdiv(rows, block_rows),)

    # Scalar params packed into one (2,) SMEM operand via scalar prefetch.
    wb = jnp.concatenate(
        [weight.reshape(1), bias.reshape(1)]
    ).astype(jnp.float32)

    y2d = pl.pallas_call(
        _affine_kernel,
        out_shape=jax.ShapeDtypeStruct((rows, LANES), jnp.float32),
        grid_spec=pltpu.PrefetchScalarGridSpec(
            num_scalar_prefetch=1,
            grid=grid,
            in_specs=[
                pl.BlockSpec((block_rows, LANES), lambda i, wb: (i, 0)),
            ],
            out_specs=pl.BlockSpec((block_rows, LANES), lambda i, wb: (i, 0)),
        ),
        compiler_params=pltpu.CompilerParams(
            dimension_semantics=("parallel",),
            vmem_limit_bytes=32 * 1024 * 1024,
        ),
    )(wb, x2d)

    if pad_amount:
        return y2d.reshape(-1)[:n].reshape(n, 1)
    return y2d.reshape(n, 1)


def init_params(key):
    # Mirror torch.nn.Linear(1, 1) init: U(-k, k) with k = 1/sqrt(in_features) = 1.
    kw, kb = jax.random.split(key)
    weight = jax.random.uniform(kw, (1, 1), jnp.float32, minval=-1.0, maxval=1.0)
    bias = jax.random.uniform(kb, (1,), jnp.float32, minval=-1.0, maxval=1.0)
    return weight, bias


if __name__ == "__main__":
    key = jax.random.PRNGKey(0)
    kparam, kx1, kx2, kx3 = jax.random.split(key, 4)

    weight, bias = init_params(kparam)

    forward = jax.jit(linear_forward)

    # Small batch of "hours", including the reference input 4.0 from the script.
    x_small = jnp.concatenate(
        [jnp.array([[4.0]], dtype=jnp.float32),
         jax.random.uniform(kx1, (7, 1), jnp.float32, minval=0.0, maxval=10.0)],
        axis=0,
    )  # [8, 1] -> exercises the padded-tail path (rows=1 block)
    y_small = jax.block_until_ready(forward(x_small, weight, bias))
    y_small_ref = x_small @ weight.T + bias
    assert y_small.shape == (8, 1)
    assert jnp.allclose(y_small, y_small_ref, atol=1e-6), (y_small, y_small_ref)

    # Lane-aligned N (no pad, pure-reshape fast path).
    x_aligned = jax.random.uniform(kx2, (256, 1), jnp.float32, minval=0.0, maxval=10.0)
    y_aligned = jax.block_until_ready(forward(x_aligned, weight, bias))
    y_aligned_ref = x_aligned @ weight.T + bias
    assert y_aligned.shape == (256, 1)
    assert jnp.allclose(y_aligned, y_aligned_ref, atol=1e-6)

    # Non-lane-aligned N to exercise pad / slice-back path with rows > 1.
    x_mid = jax.random.uniform(kx3, (1000, 1), jnp.float32, minval=0.0, maxval=10.0)
    y_mid = jax.block_until_ready(forward(x_mid, weight, bias))
    y_mid_ref = x_mid @ weight.T + bias
    assert y_mid.shape == (1000, 1)
    assert jnp.allclose(y_mid, y_mid_ref, atol=1e-6)

    print("KERNEL_OK")
</pallas_src>

<mosaic_0001>
module attributes {stable_mosaic.version = 11 : i64} {
  func.func @_affine_kernel(%arg0: i32, %arg1: memref<2xf32, #tpu.memory_space<smem>>, %arg2: memref<1x128xf32, #tpu.memory_space<vmem>>, %arg3: memref<1x128xf32, #tpu.memory_space<vmem>>) attributes {dimension_semantics = [#tpu.dimension_semantics<parallel>], iteration_bounds = array<i64: 1>, scalar_prefetch = 1 : i64, scratch_operands = 0 : i64, tpu.core_type = #tpu.core_type<tc>, window_params = [{transform_indices = @transform_0, window_bounds = array<i64: 1, 128>}, {transform_indices = @transform_1, window_bounds = array<i64: 1, 128>}]} {
    %c0 = arith.constant 0 : index
    %0 = memref.load %arg1[%c0] : memref<2xf32, #tpu.memory_space<smem>>
    %c1 = arith.constant 1 : index
    %1 = memref.load %arg1[%c1] : memref<2xf32, #tpu.memory_space<smem>>
    %c0_0 = arith.constant 0 : index
    %c0_1 = arith.constant 0 : index
    %2 = vector.load %arg2[%c0_0, %c0_1] : memref<1x128xf32, #tpu.memory_space<vmem>>, vector<1x128xf32>
    %3 = vector.broadcast %0 : f32 to vector<1x128xf32>
    %4 = arith.mulf %2, %3 : vector<1x128xf32>
    %5 = vector.broadcast %1 : f32 to vector<1x128xf32>
    %6 = arith.addf %4, %5 : vector<1x128xf32>
    %c0_2 = arith.constant 0 : index
    %c0_3 = arith.constant 0 : index
    %7 = vector.load %arg3[%c0_2, %c0_3] : memref<1x128xf32, #tpu.memory_space<vmem>>, vector<1x128xf32>
    tpu.vector_store %arg3[%c0_2, %c0_3], %6 {strides = array<i32>} : memref<1x128xf32, #tpu.memory_space<vmem>>, vector<1x128xf32>,
    return
  }
  func.func @transform_0(%arg0: i32, %arg1: memref<2xf32, #tpu.memory_space<smem>>) -> (i32, i32) {
    %c0_i32 = arith.constant 0 : i32
    %c0_i32_0 = arith.constant 0 : i32
    return %arg0, %c0_i32 : i32, i32
  }
  func.func @transform_1(%arg0: i32, %arg1: memref<2xf32, #tpu.memory_space<smem>>) -> (i32, i32) {
    %c0_i32 = arith.constant 0 : i32
    %c0_i32_0 = arith.constant 0 : i32
    return %arg0, %c0_i32 : i32, i32
  }
}

</mosaic_0001>

<llo_original>
// kernel: linear_forward.1
$region0: #{linear_forward.1}
  #allocation0 [shape = 'u32[]', space=smem, size = 0x4, offset = 0x4, fixed_abs, tag = 'smem constant byte address 0x4 - core index']
  #allocation1 [shape = 'u32[144,128]{1,0:T(1,128)}', space=vmem, size = 0x12000, scoped, tag = 'internal scratch']
  #allocation2 [shape = 's32[1]{0}', space=sflag, size = 0x4, scoped, tag = 'scoped memory for linear_forward.1']
  #allocation3 [shape = 'u8[512]{0}', space=smem, size = 0x200, scoped, tag = 'prefetched SMEM operand 0']
  %s0 = inlined_call_operand.vmem [shape: f32[2], index: 0, kind: input, shape index: {}]
  %s1 = inlined_call_operand.vmem [shape: f32[1,128], index: 1, kind: input, shape index: {}]
  %s2 = inlined_call_operand.vmem [shape: f32[1,128], index: 2, kind: output, shape index: {}]
  %s3 = sld [smem:[#allocation0]]
  $region14: #{linear_forward.1} parent=0
    _
  %s5 = ssub.s32 1, %s3
  %s6 = scalar_select 0, %s5, %s3
  %s7 = sshll.u32 %s0, 4
  %s8 = int_to_ptr.vmem [resolvable:$true] %s7
  %10 = dma.vmem_to_smem %s8, 16, [#allocation3], [#allocation2]
  %11 = dma.done [#allocation2], 16
  %12 = sfence
  // Predicated region
  $region2: #{linear_forward.1} parent=0 // pred_check
    _
  $region3: #{linear_forward.1} parent=0 // pred_check_branch
    %14 = sbr.rel (0) target = $region5
  $region4: #{linear_forward.1} parent=0 // pred_region
    _
  $region5: #{linear_forward.1} parent=0 // pred_fallthru
    _
  %s15 = sld [smem:[#allocation3]]
  %s16 = sld [smem:[#allocation3 + $0x1]]
  %v17 = vld [vmem:[%s1] sm:$0x1]
  %v18 = vstv %s15
  %v19 = vmul.f32 %v17, %v18
  %v20 = vstv %s16
  %v21 = vadd.f32 %v19, %v20
  %22 = vst [vmem:[%s2] sm:$0x1] %v21
  // Predicated region
  $region6: #{linear_forward.1} parent=0 // pred_check
    _
  $region7: #{linear_forward.1} parent=0 // pred_check_branch
    %24 = sbr.rel (0) target = $region9
  $region8: #{linear_forward.1} parent=0 // pred_region
    _
  $region9: #{linear_forward.1} parent=0 // pred_fallthru
    _
  // Predicated region
  $region10: #{linear_forward.1} parent=0 // pred_check
    _
  $region11: #{linear_forward.1} parent=0 // pred_check_branch
    %26 = sbr.rel (0) target = $region13
  $region12: #{linear_forward.1} parent=0 // pred_region
    _
  $region13: #{linear_forward.1} parent=0 // pred_fallthru
    _

</llo_original>
